<compile_context>
chip_gen: v7x
topology: tpu7x:2x2x1
jax: 0.10.0
libtpu: 0.0.40
codegen_flags: <defaults>
</compile_context>

<pallas_src>
import functools

import jax
import jax.numpy as jnp
from jax.experimental import pallas as pl
from jax.experimental.pallas import tpu as pltpu


def _round_up(x, m):
    return ((x + m - 1) // m) * m


def _cdiv(a, b):
    return -(-a // b)


def _tpu_vmem_bytes():
    """Physical VMEM per core; conservative 64 MiB fallback (v7x)."""
    phys = 64 * 1024 * 1024
    try:
        info = pltpu.get_tpu_info()
        v = int(getattr(info, "vmem_capacity_bytes", 0))
        if v >= 32 * 1024 * 1024:
            phys = v
    except Exception:
        pass
    return phys


def _num_tensorcores():
    """Best-effort TensorCore count per part; defaults to 1 (v5e/v6e)."""
    try:
        info = pltpu.get_tpu_info()
    except Exception:
        return 1
    for attr in ("num_cores", "num_tensorcores", "tensorcore_count", "core_count"):
        v = getattr(info, attr, None)
        try:
            v = int(v)
        except (TypeError, ValueError):
            continue
        if v >= 1:
            return min(v, 2)
    return 1


def _ls_ce_kernel(preds_ref, tgt_ref, out_ref, acc_ref, *, n_valid_rows, epsilon):
    p = pl.program_id(0)               # TensorCore part
    i = pl.program_id(1)               # reduction step within the part
    tpp = pl.num_programs(1)           # tiles per part

    @pl.when(i == 0)
    def _init():
        acc_ref[...] = jnp.zeros_like(acc_ref)

    x_raw = preds_ref[...].astype(jnp.float32)                  # (TB, C)
    tb, c = x_raw.shape

    # Logical row ids for this (possibly partial / clamped) tile.
    row0 = (p * tpp + i) * tb
    rows = row0 + jax.lax.broadcasted_iota(jnp.int32, (tb, 1), 0)
    row_valid = rows < n_valid_rows                             # (TB, 1) bool

    # Mask BEFORE max/exp: stale edge-tile rows must not create inf/NaN.
    x = jnp.where(row_valid, x_raw, 0.0)

    # Numerically stable logsumexp over the class (lane) axis.
    m = jnp.max(x, axis=-1, keepdims=True)                      # (TB, 1)
    lse = jnp.log(jnp.sum(jnp.exp(x - m), axis=-1, keepdims=True)) + m

    row_sum_x = jnp.sum(x, axis=-1, keepdims=True)              # (TB, 1)

    # -logp[target] pick via one-hot compare, fused compare->mul->reduce.
    cls = jax.lax.broadcasted_iota(jnp.int32, x.shape, 1)       # (TB, C)
    tgt = tgt_ref[...]                                          # (TB, 1) int32
    picked_x = jnp.sum(x * (cls == tgt), axis=-1, keepdims=True)

    # Fused per-row loss term (epsilon static):
    #   eps/C * (C*lse - sum_x) + (1-eps) * (lse - x[tgt])
    # = lse - (eps/C)*sum_x - (1-eps)*x[tgt]
    term = (lse
            - jnp.float32(epsilon / c) * row_sum_x
            - jnp.float32(1.0 - epsilon) * picked_x)            # (TB, 1)

    acc_ref[...] += jnp.where(row_valid, term, 0.0)

    # One cross-sublane reduction + one lane-dense store per part.
    @pl.when(i == tpp - 1)
    def _finalize():
        total = jnp.sum(acc_ref[...], keepdims=True)            # (1, 1)
        sub = jax.lax.broadcasted_iota(jnp.int32, (8, 128), 0)
        lane = jax.lax.broadcasted_iota(jnp.int32, (8, 128), 1)
        out_ref[...] = jnp.where((sub == 0) & (lane == 0), total, 0.0)


def label_smoothing_cross_entropy(preds, target, epsilon=0.1, reduction="mean",
                                  block_rows=None, num_parallel=None):
    n_rows, n_cls = preds.shape
    in_itemsize = jnp.dtype(preds.dtype).itemsize
    # f32 tiles need sublane multiples of 8; bf16 packing needs 16; int8/fp8 32.
    gran = 8 if in_itemsize >= 4 else 32 // in_itemsize
    c_pad = _round_up(n_cls, 128)

    if num_parallel is None:
        num_parallel = _num_tensorcores()
    num_parallel = max(1, int(num_parallel))

    phys = _tpu_vmem_bytes()
    vmem_limit = int(min(phys * 3 // 4, 100 * 1024 * 1024))

    # VMEM bytes per block-row: double-buffered preds tile + double-buffered
    # lane-padded target block + ~4 f32 (rows, C)-sized in-body temporaries
    # (x, exp(x-m), class iota, one-hot product) + lane-padded accumulator.
    bytes_per_row = (2 * c_pad * in_itemsize     # preds, double-buffered
                     + 2 * 128 * 4               # target (lane-padded), dbl-buf
                     + 4 * c_pad * 4             # f32 temporaries
                     + 128 * 4)                  # accumulator
    rows_vmem = max(gran, (phys * 2 // 5) // bytes_per_row)
    rows_dma = max(gran, (4 * 1024 * 1024) // (c_pad * in_itemsize))  # ~4 MiB tile
    per_core = _cdiv(n_rows, num_parallel)

    if block_rows is None:
        block_rows = min(rows_vmem, rows_dma, _round_up(per_core, gran))
    block_rows = max(gran, (int(block_rows) // gran) * gran)

    # Whole problem fits in one tile on one core: use the exact row extent
    # (full-dim blocks need not be 8-aligned) -> no partial block, no padding.
    if num_parallel == 1 and block_rows >= n_rows:
        block_rows = n_rows

    tiles_total = _cdiv(n_rows, block_rows)
    num_parallel = min(num_parallel, tiles_total)
    tiles_per_part = _cdiv(tiles_total, num_parallel)
    last_block = tiles_total - 1

    tgt2d = target.astype(jnp.int32).reshape(n_rows, 1)

    if tiles_per_part * num_parallel == tiles_total:
        def row_block_index(p, i):
            return (p * tiles_per_part + i, 0)
    else:
        # Uneven split across parts: clamp the fetched block in-bounds; the
        # in-kernel row mask (computed from the *logical* index) zeroes any
        # duplicated / out-of-range tile's contribution.
        def row_block_index(p, i):
            return (jnp.minimum(p * tiles_per_part + i, last_block), 0)

    kernel = functools.partial(_ls_ce_kernel, n_valid_rows=n_rows,
                               epsilon=float(epsilon))

    core_parallel = getattr(pltpu, "CORE_PARALLEL", None)
    if num_parallel > 1 and core_parallel is not None:
        dim_sems = (core_parallel, pltpu.ARBITRARY)
    else:
        dim_sems = ("arbitrary", "arbitrary")

    out = pl.pallas_call(
        kernel,
        out_shape=jax.ShapeDtypeStruct((num_parallel * 8, 128), jnp.float32),
        grid_spec=pltpu.PrefetchScalarGridSpec(
            num_scalar_prefetch=0,
            grid=(num_parallel, tiles_per_part),
            in_specs=[
                pl.BlockSpec((block_rows, n_cls), row_block_index),
                pl.BlockSpec((block_rows, 1), row_block_index),
            ],
            out_specs=pl.BlockSpec((8, 128), lambda p, i: (p, 0)),
            scratch_shapes=[pltpu.VMEM((block_rows, 1), jnp.float32)],
        ),
        compiler_params=pltpu.CompilerParams(
            dimension_semantics=dim_sems,
            vmem_limit_bytes=vmem_limit),
    )(preds, tgt2d)

    total = jnp.sum(out[:, 0])   # each part wrote its scalar at (p*8, 0); rest 0

    if reduction == "mean":
        return total / n_rows
    elif reduction == "sum":
        return total
    # TODO(synk): reduction='none' (per-row vector output) not implemented.
    raise NotImplementedError("reduction='none' not supported")


def _reference(preds, target, epsilon=0.1, reduction="mean"):
    logp = jax.nn.log_softmax(preds.astype(jnp.float32), axis=-1)
    c = preds.shape[-1]
    per_row_smooth = -logp.sum(axis=-1)
    per_row_nll = -logp[jnp.arange(preds.shape[0]), target]
    if reduction == "mean":
        loss, nll = per_row_smooth.mean(), per_row_nll.mean()
    else:
        loss, nll = per_row_smooth.sum(), per_row_nll.sum()
    return epsilon * (loss / c) + (1.0 - epsilon) * nll


if __name__ == "__main__":
    key = jax.random.PRNGKey(0)
    k1, k2, k3, k4, k5, k6, k7, k8 = jax.random.split(key, 8)

    # Case 1: aligned small shapes (mean + sum reductions).
    N, C = 16, 128
    preds = jax.random.normal(k1, (N, C), dtype=jnp.float32)
    target = jax.random.randint(k2, (N,), 0, C, dtype=jnp.int32)
    out = jax.block_until_ready(label_smoothing_cross_entropy(preds, target))
    ref = _reference(preds, target)
    assert jnp.allclose(out, ref, rtol=1e-5, atol=1e-5), (out, ref)
    out_s = jax.block_until_ready(
        label_smoothing_cross_entropy(preds, target, reduction="sum"))
    ref_s = _reference(preds, target, reduction="sum")
    assert jnp.allclose(out_s, ref_s, rtol=1e-5, atol=1e-4), (out_s, ref_s)

    # Case 2: ragged shapes -> single full-extent block, no host-side pad.
    N2, C2 = 19, 100
    preds2 = jax.random.normal(k3, (N2, C2), dtype=jnp.float32)
    target2 = jax.random.randint(k4, (N2,), 0, C2, dtype=jnp.int32)
    out2 = jax.block_until_ready(label_smoothing_cross_entropy(preds2, target2))
    ref2 = _reference(preds2, target2)
    assert jnp.allclose(out2, ref2, rtol=1e-5, atol=1e-5), (out2, ref2)

    # Case 3: multi-tile grid with an in-kernel-masked partial edge tile
    # (exercises the no-pad ragged path: 300 rows, forced 128-row tiles).
    N3, C3 = 300, 100
    preds3 = jax.random.normal(k5, (N3, C3), dtype=jnp.float32)
    target3 = jax.random.randint(k6, (N3,), 0, C3, dtype=jnp.int32)
    out3 = jax.block_until_ready(
        label_smoothing_cross_entropy(preds3, target3, block_rows=128))
    ref3 = _reference(preds3, target3)
    assert jnp.allclose(out3, ref3, rtol=1e-4, atol=1e-4), (out3, ref3)

    # Case 4: bf16 inputs (cast to f32 in-kernel).
    N4, C4 = 64, 130
    preds4 = jax.random.normal(k7, (N4, C4), dtype=jnp.float32).astype(jnp.bfloat16)
    target4 = jax.random.randint(k8, (N4,), 0, C4, dtype=jnp.int32)
    out4 = jax.block_until_ready(label_smoothing_cross_entropy(preds4, target4))
    ref4 = _reference(preds4, target4)
    assert jnp.allclose(out4, ref4, rtol=1e-3, atol=1e-3), (out4, ref4)

    print("KERNEL_OK")
</pallas_src>

<mosaic_0001>
module attributes {stable_mosaic.version = 11 : i64} {
  func.func @_ls_ce_kernel(%arg0: i32, %arg1: i32, %arg2: memref<16x128xf32, #tpu.memory_space<vmem>>, %arg3: memref<16x1xi32, #tpu.memory_space<vmem>>, %arg4: memref<8x128xf32, #tpu.memory_space<vmem>>, %arg5: memref<16x1xf32, #tpu.memory_space<vmem>>) attributes {dimension_semantics = [#tpu.dimension_semantics<arbitrary>, #tpu.dimension_semantics<arbitrary>], iteration_bounds = array<i64: 1, 1>, scalar_prefetch = 0 : i64, scratch_operands = 1 : i64, tpu.core_type = #tpu.core_type<tc>, window_params = [{transform_indices = @transform_0, window_bounds = array<i64: 16, 128>}, {transform_indices = @transform_1, window_bounds = array<i64: 16, 1>}, {transform_indices = @transform_2, window_bounds = array<i64: 8, 128>}]} {
    %c0_i32 = arith.constant 0 : i32
    %0 = arith.cmpi eq, %arg1, %c0_i32 : i32
    %1 = arith.extui %0 : i1 to i32
    %c0_i32_0 = arith.constant 0 : i32
    %2 = arith.cmpi ne, %1, %c0_i32_0 : i32
    scf.if %2 {
      %cst_18 = arith.constant 0.000000e+00 : f32
      %50 = vector.broadcast %cst_18 : f32 to vector<16x1xf32>
      %c0_19 = arith.constant 0 : index
      %c0_20 = arith.constant 0 : index
      %51 = vector.load %arg5[%c0_19, %c0_20] : memref<16x1xf32, #tpu.memory_space<vmem>>, vector<16x1xf32>
      tpu.vector_store %arg5[%c0_19, %c0_20], %50 {strides = array<i32>} : memref<16x1xf32, #tpu.memory_space<vmem>>, vector<16x1xf32>,
    } else {
    }
    %c0 = arith.constant 0 : index
    %c0_1 = arith.constant 0 : index
    %3 = vector.load %arg2[%c0, %c0_1] : memref<16x128xf32, #tpu.memory_space<vmem>>, vector<16x128xf32>
    %c1_i32 = arith.constant 1 : i32
    %4 = arith.muli %arg0, %c1_i32 : i32
    %5 = arith.addi %4, %arg1 : i32
    %c16_i32 = arith.constant 16 : i32
    %6 = arith.muli %5, %c16_i32 : i32
    %7 = tpu.iota {dimensions = array<i32: 0>} : vector<16x1xi32>
    %8 = vector.broadcast %6 : i32 to vector<16x1xi32>
    %9 = arith.addi %8, %7 : vector<16x1xi32>
    %c16_i32_2 = arith.constant 16 : i32
    %10 = vector.broadcast %c16_i32_2 : i32 to vector<16x1xi32>
    %11 = arith.cmpi slt, %9, %10 : vector<16x1xi32>
    %cst = arith.constant 0.000000e+00 : f32
    %12 = vector.shape_cast %11 : vector<16x1xi1> to vector<16x1xi1>
    %13 = vector.broadcast %12 : vector<16x1xi1> to vector<16x128xi1>
    %14 = vector.broadcast %cst : f32 to vector<16x128xf32>
    %15 = arith.select %13, %3, %14 : vector<16x128xi1>, vector<16x128xf32>
    %cst_3 = arith.constant dense<0xFF800000> : vector<16xf32>
    %16 = vector.multi_reduction <maximumf>, %15, %cst_3 [1] : vector<16x128xf32> to vector<16xf32>
    %17 = vector.shape_cast %16 : vector<16xf32> to vector<16x1xf32>
    %18 = vector.broadcast %17 : vector<16x1xf32> to vector<16x128xf32>
    %19 = arith.subf %15, %18 : vector<16x128xf32>
    %20 = math.exp %19 : vector<16x128xf32>
    %cst_4 = arith.constant dense<0.000000e+00> : vector<16xf32>
    %21 = vector.multi_reduction <add>, %20, %cst_4 [1] : vector<16x128xf32> to vector<16xf32>
    %22 = vector.shape_cast %21 : vector<16xf32> to vector<16x1xf32>
    %23 = math.log %22 : vector<16x1xf32>
    %24 = arith.addf %23, %17 : vector<16x1xf32>
    %cst_5 = arith.constant dense<0.000000e+00> : vector<16xf32>
    %25 = vector.multi_reduction <add>, %15, %cst_5 [1] : vector<16x128xf32> to vector<16xf32>
    %26 = vector.shape_cast %25 : vector<16xf32> to vector<16x1xf32>
    %27 = tpu.iota {dimensions = array<i32: 1>} : vector<16x128xi32>
    %c0_6 = arith.constant 0 : index
    %c0_7 = arith.constant 0 : index
    %28 = vector.load %arg3[%c0_6, %c0_7] : memref<16x1xi32, #tpu.memory_space<vmem>>, vector<16x1xi32>
    %29 = vector.broadcast %28 : vector<16x1xi32> to vector<16x128xi32>
    %30 = arith.cmpi eq, %27, %29 : vector<16x128xi32>
    %31 = arith.extui %30 : vector<16x128xi1> to vector<16x128xi32>
    %32 = arith.sitofp %31 : vector<16x128xi32> to vector<16x128xf32>
    %33 = arith.mulf %15, %32 : vector<16x128xf32>
    %cst_8 = arith.constant dense<0.000000e+00> : vector<16xf32>
    %34 = vector.multi_reduction <add>, %33, %cst_8 [1] : vector<16x128xf32> to vector<16xf32>
    %35 = vector.shape_cast %34 : vector<16xf32> to vector<16x1xf32>
    %cst_9 = arith.constant 7.812500e-04 : f32
    %36 = vector.broadcast %cst_9 : f32 to vector<16x1xf32>
    %37 = arith.mulf %36, %26 : vector<16x1xf32>
    %38 = arith.subf %24, %37 : vector<16x1xf32>
    %cst_10 = arith.constant 0.899999976 : f32
    %39 = vector.broadcast %cst_10 : f32 to vector<16x1xf32>
    %40 = arith.mulf %39, %35 : vector<16x1xf32>
    %41 = arith.subf %38, %40 : vector<16x1xf32>
    %c0_11 = arith.constant 0 : index
    %c0_12 = arith.constant 0 : index
    %42 = vector.load %arg5[%c0_11, %c0_12] : memref<16x1xf32, #tpu.memory_space<vmem>>, vector<16x1xf32>
    %cst_13 = arith.constant 0.000000e+00 : f32
    %43 = vector.broadcast %cst_13 : f32 to vector<16x1xf32>
    %44 = arith.select %11, %41, %43 : vector<16x1xi1>, vector<16x1xf32>
    %45 = arith.addf %42, %44 : vector<16x1xf32>
    %c0_14 = arith.constant 0 : index
    %c0_15 = arith.constant 0 : index
    %46 = vector.load %arg5[%c0_14, %c0_15] : memref<16x1xf32, #tpu.memory_space<vmem>>, vector<16x1xf32>
    tpu.vector_store %arg5[%c0_14, %c0_15], %45 {strides = array<i32>} : memref<16x1xf32, #tpu.memory_space<vmem>>, vector<16x1xf32>,
    %c0_i32_16 = arith.constant 0 : i32
    %47 = arith.cmpi eq, %arg1, %c0_i32_16 : i32
    %48 = arith.extui %47 : i1 to i32
    %c0_i32_17 = arith.constant 0 : i32
    %49 = arith.cmpi ne, %48, %c0_i32_17 : i32
    scf.if %49 {
      %c0_18 = arith.constant 0 : index
      %c0_19 = arith.constant 0 : index
      %50 = vector.load %arg5[%c0_18, %c0_19] : memref<16x1xf32, #tpu.memory_space<vmem>>, vector<16x1xf32>
      %51 = vector.shape_cast %50 : vector<16x1xf32> to vector<1x16x1xf32>
      %cst_20 = arith.constant dense<0.000000e+00> : vector<1xf32>
      %52 = vector.multi_reduction <add>, %51, %cst_20 [1, 2] : vector<1x16x1xf32> to vector<1xf32>
      %53 = vector.shape_cast %52 : vector<1xf32> to vector<1x1x1xf32>
      %54 = vector.extract %53[0, 0, 0] : f32 from vector<1x1x1xf32>
      %55 = vector.broadcast %54 : f32 to vector<1x1xf32>
      %56 = tpu.iota {dimensions = array<i32: 0>} : vector<8x128xi32>
      %57 = tpu.iota {dimensions = array<i32: 1>} : vector<8x128xi32>
      %c0_i32_21 = arith.constant 0 : i32
      %58 = vector.broadcast %c0_i32_21 : i32 to vector<8x128xi32>
      %59 = arith.cmpi eq, %56, %58 : vector<8x128xi32>
      %c0_i32_22 = arith.constant 0 : i32
      %60 = vector.broadcast %c0_i32_22 : i32 to vector<8x128xi32>
      %61 = arith.cmpi eq, %57, %60 : vector<8x128xi32>
      %62 = arith.andi %59, %61 : vector<8x128xi1>
      %cst_23 = arith.constant 0.000000e+00 : f32
      %63 = vector.shape_cast %55 : vector<1x1xf32> to vector<1x1xf32>
      %64 = vector.broadcast %63 : vector<1x1xf32> to vector<8x128xf32>
      %65 = vector.broadcast %cst_23 : f32 to vector<8x128xf32>
      %66 = arith.select %62, %64, %65 : vector<8x128xi1>, vector<8x128xf32>
      %c0_24 = arith.constant 0 : index
      %c0_25 = arith.constant 0 : index
      %67 = vector.load %arg4[%c0_24, %c0_25] : memref<8x128xf32, #tpu.memory_space<vmem>>, vector<8x128xf32>
      tpu.vector_store %arg4[%c0_24, %c0_25], %66 {strides = array<i32>} : memref<8x128xf32, #tpu.memory_space<vmem>>, vector<8x128xf32>,
    } else {
    }
    return
  }
  func.func @transform_0(%arg0: i32, %arg1: i32) -> (i32, i32) {
    %c1_i32 = arith.constant 1 : i32
    %0 = arith.muli %arg0, %c1_i32 : i32
    %1 = arith.addi %0, %arg1 : i32
    %c0_i32 = arith.constant 0 : i32
    %c0_i32_0 = arith.constant 0 : i32
    return %1, %c0_i32 : i32, i32
  }
  func.func @transform_1(%arg0: i32, %arg1: i32) -> (i32, i32) {
    %c1_i32 = arith.constant 1 : i32
    %0 = arith.muli %arg0, %c1_i32 : i32
    %1 = arith.addi %0, %arg1 : i32
    %c0_i32 = arith.constant 0 : i32
    %c0_i32_0 = arith.constant 0 : i32
    return %1, %c0_i32 : i32, i32
  }
  func.func @transform_2(%arg0: i32, %arg1: i32) -> (i32, i32) {
    %c0_i32 = arith.constant 0 : i32
    %c0_i32_0 = arith.constant 0 : i32
    return %arg0, %c0_i32 : i32, i32
  }
}

</mosaic_0001>

<llo_original>
// kernel: tpu_custom_call.1
$region0: #{tpu_custom_call.1}
  #allocation0 [shape = 'u32[]', space=smem, size = 0x4, offset = 0x4, fixed_abs, tag = 'smem constant byte address 0x4 - core index']
  #allocation1 [shape = 'u32[144,128]{1,0:T(1,128)}', space=vmem, size = 0x12000, scoped, tag = 'internal scratch']
  #allocation2 [shape = 'f32[16,1]{1,0:T(8,128)}', space=vmem, size = 0x2000, scoped, tag = 'scratch operand']
  %s0 = inlined_call_operand.vmem [shape: f32[16,128], index: 0, kind: input, shape index: {}]
  %s1 = inlined_call_operand.vmem [shape: s32[16,1], index: 1, kind: input, shape index: {}]
  %s2 = inlined_call_operand.hbm [shape: f32[8,128], index: 2, kind: output, shape index: {}]
  %s3 = sld [smem:[#allocation0]]
  $region26: #{tpu_custom_call.1} parent=0
    _
  %s5 = ssub.s32 1, %s3
  %s6 = scalar_select 0, %s5, %s3
  $region1: #{tpu_custom_call.1} parent=0
    #allocation3 [shape = 'u8[4096]{0}', space=vmem, size = 0x1000, scoped, tag = 'output window, operand 0, single buffered']
    #allocation4 [shape = 's32[1]{0}', space=sflag, size = 0x4, scoped, tag = 'scoped memory for tpu_custom_call.1']
    %7 = vsyncpa [#allocation4], 0
    // Predicated region
    $region2: #{tpu_custom_call.1} parent=1 // pred_check
      _
    $region3: #{tpu_custom_call.1} parent=1 // pred_check_branch
      %9 = sbr.rel (0) target = $region5
    $region4: #{tpu_custom_call.1} parent=1 // pred_region
      %s10 = sadd.s32 0, 0
      %s11 = smul.u32 2, %s10
      %p12 = scmp.lt.s32.totalorder %s11, 1
      %s13 = scalar_select %p12, %s11, 1
      %s14 = smul.addr %s13, 8
      %s15 = scalar_lea.vmem %s0, %s14
      %s16 = sadd.s32 0, 0
      %s17 = smul.u32 2, %s16
    $region5: #{tpu_custom_call.1} parent=1 // pred_fallthru
      _
    // Predicated region
    $region6: #{tpu_custom_call.1} parent=1 // pred_check
      _
    $region7: #{tpu_custom_call.1} parent=1 // pred_check_branch
      %19 = sbr.rel (0) target = $region9
    $region8: #{tpu_custom_call.1} parent=1 // pred_region
      %s20 = sadd.s32 0, 0
      %s21 = smul.u32 2, %s20
      %p22 = scmp.lt.s32.totalorder %s21, 1
      %s23 = scalar_select %p22, %s21, 1
      %s24 = smul.addr %s23, 8
      %s25 = scalar_lea.vmem %s1, %s24
      %s26 = sadd.s32 0, 0
      %s27 = smul.u32 2, %s26
    $region9: #{tpu_custom_call.1} parent=1 // pred_fallthru
      _
    %s28 = sadd.s32 0, 0
    %s29 = smul.u32 2, %s28
    %p30 = scmp.lt.s32.totalorder %s29, 1
    %s31 = scalar_select %p30, %s29, 1
    %s32 = smul.addr %s31, 8
    %s33 = scalar_lea.vmem %s0, %s32
    %s34 = sadd.s32 0, 0
    %s35 = smul.u32 2, %s34
    %p36 = scmp.lt.s32.totalorder %s35, 1
    %s37 = scalar_select %p36, %s35, 1
    %s38 = smul.addr %s37, 8
    %s39 = scalar_lea.vmem %s1, %s38
    %s40 = sadd.s32 0, 0
    %s41 = smul.u32 2, %s40
    %p42 = scmp.lt.s32.totalorder %s41, 1
    %s43 = scalar_select %p42, %s41, 1
    %s44 = smul.addr %s43, 8
    %s45 = scalar_lea.vmem %s0, %s44
    %s46 = sadd.s32 0, 0
    %s47 = smul.u32 2, %s46
    %s48 = sadd.s32 0, 0
    %s49 = smul.u32 2, %s48
    %p50 = scmp.lt.s32.totalorder %s49, 1
    %s51 = scalar_select %p50, %s49, 1
    %s52 = smul.addr %s51, 8
    %s53 = scalar_lea.vmem %s1, %s52
    %s54 = sadd.s32 0, 0
    %s55 = smul.u32 2, %s54
    %p56 = scmp.eq.s32.totalorder 0, 0
    // Predicated region
    $region10: #{tpu_custom_call.1} parent=1 // pred_check
      %p57 = pneg %p56
    $region11: #{tpu_custom_call.1} parent=1 // pred_check_branch
      %59 = sbr.rel (%p57) target = $region13
    $region12: #{tpu_custom_call.1} parent=1 // pred_region
      %vm60 = vcmask 7168
      %61 = vst.msk [vmem:[#allocation2] sm:$0xff] %vm60, 0.0
      %62 = vst.msk [vmem:[#allocation2 + $0x8] sm:$0xff] %vm60, 0.0
    $region13: #{tpu_custom_call.1} parent=1 // pred_fallthru
      _
    %v63 = vld [vmem:[%s45] sm:$0xff]
    %v64 = vld [vmem:[%s45 + $0x8] sm:$0xff]
    %s65 = sadd.s32 0, 0
    %s66 = smul.u32 %s65, 16
    %v67 = vlaneseq
    %v68 = vshrl.u32 %v67, 7
    %v69 = vadd.s32 %v68, 8
    %v70 = vstv %s66
    %v71 = vadd.s32 %v70, %v68
    %v72 = vadd.s32 %v70, %v69
    %vm73 = vcmp.lt.s32.totalorder %v71, 16
    %vm74 = vcmp.lt.s32.totalorder %v72, 16
    %v75 = vsel %vm73, 1, 0
    %v76 = vsel %vm74, 1, 0
    %vm77 = vcmp.eq.s32.totalorder %v75, 1
    %vm78 = vcmp.eq.s32.totalorder %v76, 1
    %v79 = vsel %vm77, %v63, 0.0
    %v80 = vsel %vm78, %v64, 0.0
    %81 = vmax.xlane.f32.xlu0 %v79
    %v82 = vpop.xlane.xlu0 %81
    %83 = vmax.xlane.f32.xlu0 %v80
    %v84 = vpop.xlane.xlu0 %83
    %v85 = vsub.f32 %v79, %v82
    %v86 = vsub.f32 %v80, %v84
    %v87 = vmul.f32 %v85, 1.442695
    %v88 = vpow.pop %v87
    %v89 = vmul.f32 %v86, 1.442695
    %v90 = vpow.pop %v89
    %91 = vadd.xlane.f32.xlu0 %v88
    %v92 = vpop.xlane.xlu0 %91
    %93 = vadd.xlane.f32.xlu0 %v90
    %v94 = vpop.xlane.xlu0 %93
    %v95 = vlog2.pop %v92
    %v96 = vmul.f32 %v95, 0.6931472
    %v97 = vlog2.pop %v94
    %v98 = vmul.f32 %v97, 0.6931472
    %v99 = vadd.f32 %v96, %v82
    %v100 = vadd.f32 %v98, %v84
    %101 = vadd.xlane.f32.xlu0 %v79
    %v102 = vpop.xlane.xlu0 %101
    %103 = vadd.xlane.f32.xlu0 %v80
    %v104 = vpop.xlane.xlu0 %103
    %v105 = vlaneseq
    %v106 = vand.u32 %v105, 127
    %v107 = vld [vmem:[%s53] sm:$0xff]
    %v108 = vld [vmem:[%s53 + $0x8] sm:$0xff]
    %109 = vset.pattern.permute.xlu0 0
    %110 = vperm.xlu0 %109, %v107
    %v111 = vpop.permute.xlu0 %110
    %112 = vset.pattern.permute.xlu0 0
    %113 = vperm.xlu0 %112, %v108
    %v114 = vpop.permute.xlu0 %113
    %vm115 = vcmp.eq.s32.totalorder %v106, %v111
    %vm116 = vcmp.eq.s32.totalorder %v106, %v114
    %v117 = vsel %vm115, 1, 0
    %v118 = vsel %vm116, 1, 0
    %v119 = vcvt.s32.f32 %v117
    %v120 = vcvt.s32.f32 %v118
    %v121 = vmul.f32 %v79, %v119
    %v122 = vmul.f32 %v80, %v120
    %123 = vadd.xlane.f32.xlu0 %v121
    %v124 = vpop.xlane.xlu0 %123
    %125 = vadd.xlane.f32.xlu0 %v122
    %v126 = vpop.xlane.xlu0 %125
    %v127 = vmul.f32 %v102, 0.00078125
    %v128 = vmul.f32 %v104, 0.00078125
    %v129 = vsub.f32 %v99, %v127
    %v130 = vsub.f32 %v100, %v128
    %v131 = vmul.f32 %v124, 0.9
    %v132 = vmul.f32 %v126, 0.9
    %v133 = vsub.f32 %v129, %v131
    %v134 = vsub.f32 %v130, %v132
    %v135 = vld [vmem:[#allocation2] sm:$0xff]
    %v136 = vld [vmem:[#allocation2 + $0x8] sm:$0xff]
    %v137 = vsel %vm73, %v133, 0.0
    %v138 = vsel %vm74, %v134, 0.0
    %v139 = vadd.f32 %v135, %v137
    %v140 = vadd.f32 %v136, %v138
    %vm141 = vcmask 7168
    %142 = vst.msk [vmem:[#allocation2] sm:$0xff] %vm141, %v139
    %143 = vst.msk [vmem:[#allocation2 + $0x8] sm:$0xff] %vm141, %v140
    // Predicated region
    $region14: #{tpu_custom_call.1} parent=1 // pred_check
      %p144 = pneg %p56
    $region15: #{tpu_custom_call.1} parent=1 // pred_check_branch
      %146 = sbr.rel (%p144) target = $region17
    $region16: #{tpu_custom_call.1} parent=1 // pred_region
      %v147 = vld [vmem:[#allocation2] sm:$0xff]
      %v148 = vld [vmem:[#allocation2 + $0x8] sm:$0xff]
      %v149 = vsel %vm141, %v147, 0.0
      %v150 = vsel %vm141, %v148, 0.0
      %v151 = vadd.f32 %v149, %v150
      %152 = vadd.xlane.f32.xlu0 %v151
      %v153 = vpop.xlane.xlu0 %152
      %v154 = vrot.slane %v153, 4
      %v155 = vadd.f32 %v153, %v154
      %v156 = vrot.slane %v155, 2
      %v157 = vadd.f32 %v155, %v156
      %v158 = vrot.slane %v157, 1
      %v159 = vadd.f32 %v157, %v158
      %s160 = vtos %v159
      %vm161 = vcmp.eq.s32.totalorder %v68, 0
      %vm162 = vcmp.eq.s32.totalorder %v106, 0
      %vm163 = vmand %vm161, %vm162
      %v164 = vstv %s160
      %v165 = vsel %vm163, %v164, 0.0
      %166 = vst [vmem:[#allocation3] sm:$0xff] %v165
    $region17: #{tpu_custom_call.1} parent=1 // pred_fallthru
      _
    // Predicated region
    $region18: #{tpu_custom_call.1} parent=1 // pred_check
      _
    $region19: #{tpu_custom_call.1} parent=1 // pred_check_branch
      %168 = sbr.rel (0) target = $region21
    $region20: #{tpu_custom_call.1} parent=1 // pred_region
      %s170 = ssub.s32 128, 128
      %171 = vsyncadd [#allocation4], %s170
      %s173 = sshll.u32 [#allocation3], 4
      %s174 = int_to_ptr.vmem [resolvable:$true] %s173
      %176 = dma.vmem_to_hbm [thread:$0]  %s174, 128, %s2, [#allocation4]
    $region21: #{tpu_custom_call.1} parent=1 // pred_fallthru
      _
    // Predicated region
    $region22: #{tpu_custom_call.1} parent=1 // pred_check
      _
    $region23: #{tpu_custom_call.1} parent=1 // pred_check_branch
      %178 = sbr.rel (0) target = $region25
    $region24: #{tpu_custom_call.1} parent=1 // pred_region
      %179 = dma.done [#allocation4], 128
    $region25: #{tpu_custom_call.1} parent=1 // pred_fallthru
      _
    %180 = vsyncpa [#allocation4], 1

</llo_original>
